<compile_context>
chip_gen: v5e
topology: v5e:2x2
jax: 0.10.0
libtpu: 0.0.40
codegen_flags: <defaults>
</compile_context>

<pallas_src>
import jax
import jax.numpy as jnp
from jax.experimental import pallas as pl
from jax.experimental.pallas import tpu as pltpu

H1, H2 = 30, 15      # logical hidden widths (PyTorch module)
H1P, H2P = 32, 16    # zero-padded widths (sublane-friendly, no masked vregs)


def _round_up(n, m):
    return ((n + m - 1) // m) * m


def _vmem_capacity_bytes():
    try:
        return int(pltpu.get_tpu_info().vmem_capacity_bytes)
    except Exception:
        return 64 * 1024 * 1024   # v7x-safe fallback


def mlp_kernel(xT_ref, w1T_ref, b1_ref, w2T_ref, b2_ref, w3_ref, b3_ref, o_ref):
    # xT tile: (IN, TB) bf16 — batch on the lane axis throughout.
    xT = xT_ref[...]

    # Layer 1: (H1P, IN) @ (IN, TB) -> (H1P, TB); f32 MXU accumulate,
    # bias + ReLU in f32 on the VPU (lane-broadcast bias, full-lane ops).
    h1 = jnp.dot(w1T_ref[...], xT, preferred_element_type=jnp.float32)
    h1 = jnp.maximum(h1 + b1_ref[...], 0.0)                       # (H1P, TB)

    # Layer 2: (H2P, H1P) @ (H1P, TB) -> (H2P, TB).
    h2 = jnp.dot(w2T_ref[...], h1.astype(jnp.bfloat16),
                 preferred_element_type=jnp.float32)
    h2 = jnp.maximum(h2 + b2_ref[...], 0.0)                       # (H2P, TB)

    # Layer 3: output width 1 -> 16-sublane reduce; result is already a
    # lane-dense (1, TB) row, so the store is an unmasked full-lane vst.
    out = jnp.sum(h2 * w3_ref[...], axis=0, keepdims=True) + b3_ref[0]
    o_ref[...] = out.astype(o_ref.dtype)


def mlp_classifier_forward(x, kparams, *, block_cols_max=8192):
    """x: (B, input_size) f32. kparams: prepared (padded/transposed) params.
    Returns (B, 1) f32."""
    B, IN = x.shape
    assert kparams["w1T"].shape == (H1P, IN)

    # Generation-aware VMEM budget (v7x: 64 MiB physical -> 32 MiB limit;
    # v5e/v6e: 128 MiB physical -> up to 64 MiB limit).
    vmem_cap = _vmem_capacity_bytes()
    vmem_limit = max(32 * 1024 * 1024, min(vmem_cap // 2, 64 * 1024 * 1024))

    # Per-batch-column VMEM footprint: bf16 xT tile (double-buffered),
    # f32 h1/h2 live values, f32 output (double-buffered).
    per_col = 2 * (IN * 2) + (H1P + H2P) * 4 + 2 * 4
    budget = vmem_limit // 2                      # headroom for weights/scratch
    tb_max = max(128, min(block_cols_max, (budget // per_col) // 128 * 128))

    b128 = _round_up(B, 128)
    tb = min(tb_max, b128)
    if b128 <= tb and b128 >= 1024:
        # Guarantee >=2 grid steps so v7x's two TensorCores both get work.
        tb = _round_up(-(-b128 // 2), 128)
    b_pad = _round_up(B, tb)
    grid = (b_pad // tb,)

    # Single fused wrapper pass: transpose + bf16 cast (+ batch pad if needed).
    xT = x.T.astype(jnp.bfloat16)                 # (IN, B)
    if b_pad != B:
        xT = jnp.pad(xT, ((0, 0), (0, b_pad - B)))

    w1T, b1 = kparams["w1T"], kparams["b1"]
    w2T, b2 = kparams["w2T"], kparams["b2"]
    w3, b3 = kparams["w3"], kparams["b3"]

    flops = 2 * b_pad * (IN * H1P + H1P * H2P + H2P)
    bytes_accessed = (b_pad * IN * 2 + b_pad * 4
                      + (H1P * IN + H2P * H1P) * 2
                      + (H1P + H2P + H2P + 1) * 4)

    out_pad = pl.pallas_call(
        mlp_kernel,
        out_shape=jax.ShapeDtypeStruct((1, b_pad), jnp.float32),
        grid=grid,
        in_specs=[
            pl.BlockSpec((IN, tb), lambda i: (0, i)),        # xT: streamed tiles
            pl.BlockSpec((H1P, IN), lambda i: (0, 0)),       # weights/biases:
            pl.BlockSpec((H1P, 1), lambda i: (0, 0)),        #   resident in VMEM
            pl.BlockSpec((H2P, H1P), lambda i: (0, 0)),
            pl.BlockSpec((H2P, 1), lambda i: (0, 0)),
            pl.BlockSpec((H2P, 1), lambda i: (0, 0)),
            pl.BlockSpec(memory_space=pltpu.MemorySpace.SMEM),  # b3 scalar
        ],
        out_specs=pl.BlockSpec((1, tb), lambda i: (0, i)),   # lane-dense output
        compiler_params=pltpu.CompilerParams(
            dimension_semantics=("parallel",),
            vmem_limit_bytes=vmem_limit,
        ),
        cost_estimate=pl.CostEstimate(
            flops=flops, transcendentals=0, bytes_accessed=bytes_accessed),
    )(xT, w1T, b1, w2T, b2, w3, b3)

    return out_pad[0, :B].reshape(B, 1)


def init_params(key, input_size):
    """nn.Linear-style init (uniform +-1/sqrt(fan_in)); weights as (in, out), f32."""
    def linear_init(k, fan_in, fan_out):
        kw, kb = jax.random.split(k)
        bound = 1.0 / jnp.sqrt(fan_in)
        w = jax.random.uniform(kw, (fan_in, fan_out), jnp.float32, -bound, bound)
        b = jax.random.uniform(kb, (fan_out,), jnp.float32, -bound, bound)
        return w, b

    k1, k2, k3 = jax.random.split(key, 3)
    w1, b1 = linear_init(k1, input_size, H1)
    w2, b2 = linear_init(k2, H1, H2)
    w3, b3 = linear_init(k3, H2, 1)
    return {"w1": w1, "b1": b1, "w2": w2, "b2": b2, "w3": w3, "b3": b3}


def prepare_params(p):
    """Transpose to feature-major, zero-pad hidden dims (30->32, 15->16),
    cast MXU operands to bf16.

    Padded bias entries are zero and the matching columns/rows of the next
    layer's weight are zero, so padded units contribute exactly nothing.
    """
    in_features = p["w1"].shape[0]
    w1T = jnp.zeros((H1P, in_features), jnp.float32).at[:H1, :].set(p["w1"].T)
    b1 = jnp.zeros((H1P, 1), jnp.float32).at[:H1, 0].set(p["b1"].reshape(-1))
    w2T = jnp.zeros((H2P, H1P), jnp.float32).at[:H2, :H1].set(p["w2"].T)
    b2 = jnp.zeros((H2P, 1), jnp.float32).at[:H2, 0].set(p["b2"].reshape(-1))
    w3 = jnp.zeros((H2P, 1), jnp.float32).at[:H2, 0].set(p["w3"].reshape(-1))
    b3 = p["b3"].reshape((1,)).astype(jnp.float32)
    return {
        "w1T": w1T.astype(jnp.bfloat16), "b1": b1,
        "w2T": w2T.astype(jnp.bfloat16), "b2": b2,
        "w3": w3, "b3": b3,
    }


def mlp_reference_quantized(x, kp):
    """Pure-JAX reference mirroring the kernel's bf16 storage/feed exactly.

    Note: x, W1, W2 and the layer-1->2 activation are bf16-quantized like the
    kernel, so outputs differ from a pure-f32 PyTorch MLP by bf16 rounding.
    """
    f32 = jnp.float32
    xb = x.astype(jnp.bfloat16).astype(f32)
    w1 = kp["w1T"].astype(f32).T                 # (IN, H1P)
    w2 = kp["w2T"].astype(f32).T                 # (H1P, H2P)
    h1 = jnp.maximum(xb @ w1 + kp["b1"].reshape(1, -1), 0.0)
    h1 = h1.astype(jnp.bfloat16).astype(f32)
    h2 = jnp.maximum(h1 @ w2 + kp["b2"].reshape(1, -1), 0.0)
    return h2 @ kp["w3"] + kp["b3"]              # (B, 1)


if __name__ == "__main__":
    key = jax.random.PRNGKey(0)
    k_x, k_p = jax.random.split(key)

    batch = 8
    input_size = 32

    x = jax.random.normal(k_x, (batch, input_size), dtype=jnp.float32)
    params = init_params(k_p, input_size)
    kparams = prepare_params(params)

    out = mlp_classifier_forward(x, kparams)
    out = jax.block_until_ready(out)

    ref = mlp_reference_quantized(x, kparams)
    assert out.shape == (batch, 1)
    assert jnp.allclose(out, ref, atol=2e-3, rtol=2e-3)

    print("KERNEL_OK")
</pallas_src>

<mosaic_0001>
module attributes {stable_mosaic.version = 11 : i64} {
  func.func @mlp_kernel(%arg0: i32, %arg1: memref<32x128xbf16, #tpu.memory_space<vmem>>, %arg2: memref<32x32xbf16, #tpu.memory_space<vmem>>, %arg3: memref<32x1xf32, #tpu.memory_space<vmem>>, %arg4: memref<16x32xbf16, #tpu.memory_space<vmem>>, %arg5: memref<16x1xf32, #tpu.memory_space<vmem>>, %arg6: memref<16x1xf32, #tpu.memory_space<vmem>>, %arg7: memref<1xf32, #tpu.memory_space<smem>>, %arg8: memref<1x128xf32, #tpu.memory_space<vmem>>) attributes {dimension_semantics = [#tpu.dimension_semantics<parallel>], iteration_bounds = array<i64: 1>, scalar_prefetch = 0 : i64, scratch_operands = 0 : i64, tpu.core_type = #tpu.core_type<tc>, window_params = [{transform_indices = @transform_0, window_bounds = array<i64: 32, 128>}, {pipeline_mode = #tpu.pipeline_mode<synchronous>, transform_indices = @transform_1, window_bounds = array<i64: 32, 32>}, {pipeline_mode = #tpu.pipeline_mode<synchronous>, transform_indices = @transform_2, window_bounds = array<i64: 32, 1>}, {pipeline_mode = #tpu.pipeline_mode<synchronous>, transform_indices = @transform_3, window_bounds = array<i64: 16, 32>}, {pipeline_mode = #tpu.pipeline_mode<synchronous>, transform_indices = @transform_4, window_bounds = array<i64: 16, 1>}, {pipeline_mode = #tpu.pipeline_mode<synchronous>, transform_indices = @transform_5, window_bounds = array<i64: 16, 1>}, {transform_indices = @transform_6, window_bounds = array<i64: 1>}, {transform_indices = @transform_7, window_bounds = array<i64: 1, 128>}]} {
    %c0 = arith.constant 0 : index
    %c0_0 = arith.constant 0 : index
    %0 = vector.load %arg1[%c0, %c0_0] : memref<32x128xbf16, #tpu.memory_space<vmem>>, vector<32x128xbf16>
    %c0_1 = arith.constant 0 : index
    %c0_2 = arith.constant 0 : index
    %1 = vector.load %arg2[%c0_1, %c0_2] : memref<32x32xbf16, #tpu.memory_space<vmem>>, vector<32x32xbf16>
    %cst = arith.constant dense<0.000000e+00> : vector<32x128xf32>
    %2 = tpu.matmul %1, %0, %cst {dimension_numbers = #tpu.dot_dimension_numbers<[1], [0], [0], [1], [0, 0, 1, 1], [], []>} : vector<32x32xbf16>, vector<32x128xbf16>, vector<32x128xf32> -> vector<32x128xf32>
    %c0_3 = arith.constant 0 : index
    %c0_4 = arith.constant 0 : index
    %3 = vector.load %arg3[%c0_3, %c0_4] : memref<32x1xf32, #tpu.memory_space<vmem>>, vector<32x1xf32>
    %4 = vector.broadcast %3 : vector<32x1xf32> to vector<32x128xf32>
    %5 = arith.addf %2, %4 : vector<32x128xf32>
    %cst_5 = arith.constant 0.000000e+00 : f32
    %6 = vector.broadcast %cst_5 : f32 to vector<32x128xf32>
    %7 = arith.maximumf %5, %6 : vector<32x128xf32>
    %c0_6 = arith.constant 0 : index
    %c0_7 = arith.constant 0 : index
    %8 = vector.load %arg4[%c0_6, %c0_7] : memref<16x32xbf16, #tpu.memory_space<vmem>>, vector<16x32xbf16>
    %9 = arith.truncf %7 : vector<32x128xf32> to vector<32x128xbf16>
    %cst_8 = arith.constant dense<0.000000e+00> : vector<16x128xf32>
    %10 = tpu.matmul %8, %9, %cst_8 {dimension_numbers = #tpu.dot_dimension_numbers<[1], [0], [0], [1], [0, 0, 1, 1], [], []>} : vector<16x32xbf16>, vector<32x128xbf16>, vector<16x128xf32> -> vector<16x128xf32>
    %c0_9 = arith.constant 0 : index
    %c0_10 = arith.constant 0 : index
    %11 = vector.load %arg5[%c0_9, %c0_10] : memref<16x1xf32, #tpu.memory_space<vmem>>, vector<16x1xf32>
    %12 = vector.broadcast %11 : vector<16x1xf32> to vector<16x128xf32>
    %13 = arith.addf %10, %12 : vector<16x128xf32>
    %cst_11 = arith.constant 0.000000e+00 : f32
    %14 = vector.broadcast %cst_11 : f32 to vector<16x128xf32>
    %15 = arith.maximumf %13, %14 : vector<16x128xf32>
    %c0_12 = arith.constant 0 : index
    %c0_13 = arith.constant 0 : index
    %16 = vector.load %arg6[%c0_12, %c0_13] : memref<16x1xf32, #tpu.memory_space<vmem>>, vector<16x1xf32>
    %17 = vector.broadcast %16 : vector<16x1xf32> to vector<16x128xf32>
    %18 = arith.mulf %15, %17 : vector<16x128xf32>
    %cst_14 = arith.constant dense<0.000000e+00> : vector<128xf32>
    %19 = vector.multi_reduction <add>, %18, %cst_14 [0] : vector<16x128xf32> to vector<128xf32>
    %20 = vector.shape_cast %19 : vector<128xf32> to vector<1x128xf32>
    %c0_15 = arith.constant 0 : index
    %21 = memref.load %arg7[%c0_15] : memref<1xf32, #tpu.memory_space<smem>>
    %22 = vector.broadcast %21 : f32 to vector<1x128xf32>
    %23 = arith.addf %20, %22 : vector<1x128xf32>
    %c0_16 = arith.constant 0 : index
    %c0_17 = arith.constant 0 : index
    %24 = vector.load %arg8[%c0_16, %c0_17] : memref<1x128xf32, #tpu.memory_space<vmem>>, vector<1x128xf32>
    tpu.vector_store %arg8[%c0_16, %c0_17], %23 {strides = array<i32>} : memref<1x128xf32, #tpu.memory_space<vmem>>, vector<1x128xf32>,
    return
  }
  func.func @transform_0(%arg0: i32) -> (i32, i32) {
    %c0_i32 = arith.constant 0 : i32
    %c0_i32_0 = arith.constant 0 : i32
    return %c0_i32, %arg0 : i32, i32
  }
  func.func @transform_1(%arg0: i32) -> (i32, i32) {
    %c0_i32 = arith.constant 0 : i32
    %c0_i32_0 = arith.constant 0 : i32
    %c0_i32_1 = arith.constant 0 : i32
    return %c0_i32, %c0_i32_0 : i32, i32
  }
  func.func @transform_2(%arg0: i32) -> (i32, i32) {
    %c0_i32 = arith.constant 0 : i32
    %c0_i32_0 = arith.constant 0 : i32
    %c0_i32_1 = arith.constant 0 : i32
    return %c0_i32, %c0_i32_0 : i32, i32
  }
  func.func @transform_3(%arg0: i32) -> (i32, i32) {
    %c0_i32 = arith.constant 0 : i32
    %c0_i32_0 = arith.constant 0 : i32
    %c0_i32_1 = arith.constant 0 : i32
    return %c0_i32, %c0_i32_0 : i32, i32
  }
  func.func @transform_4(%arg0: i32) -> (i32, i32) {
    %c0_i32 = arith.constant 0 : i32
    %c0_i32_0 = arith.constant 0 : i32
    %c0_i32_1 = arith.constant 0 : i32
    return %c0_i32, %c0_i32_0 : i32, i32
  }
  func.func @transform_5(%arg0: i32) -> (i32, i32) {
    %c0_i32 = arith.constant 0 : i32
    %c0_i32_0 = arith.constant 0 : i32
    %c0_i32_1 = arith.constant 0 : i32
    return %c0_i32, %c0_i32_0 : i32, i32
  }
  func.func @transform_6(%arg0: i32) -> i32 {
    %c0_i32 = arith.constant 0 : i32
    %c0_i32_0 = arith.constant 0 : i32
    return %c0_i32 : i32
  }
  func.func @transform_7(%arg0: i32) -> (i32, i32) {
    %c0_i32 = arith.constant 0 : i32
    %c0_i32_0 = arith.constant 0 : i32
    return %c0_i32, %arg0 : i32, i32
  }
}

</mosaic_0001>

<llo_original>
// kernel: tpu_custom_call.1
$region0: #{tpu_custom_call.1}
  #allocation0 [shape = 'u32[]', space=smem, size = 0x4, offset = 0x4, fixed_abs, tag = 'smem constant byte address 0x4 - core index']
  #allocation1 [shape = 'u32[72,128]{1,0:T(1,128)}', space=vmem, size = 0x9000, scoped, tag = 'internal scratch']
  #allocation2 [shape = 'f32[1]{0:T(128)S(6)}', space=smem, size = 0x200, scoped, tag = 'scoped memory for tpu_custom_call.1']
  %s0 = inlined_call_operand.vmem [shape: bf16[32,128], index: 0, kind: input, shape index: {}]
  %s1 = inlined_call_operand.vmem [shape: bf16[32,32], index: 1, kind: input, shape index: {}]
  %s2 = inlined_call_operand.vmem [shape: f32[32,1], index: 2, kind: input, shape index: {}]
  %s3 = inlined_call_operand.vmem [shape: bf16[16,32], index: 3, kind: input, shape index: {}]
  %s4 = inlined_call_operand.vmem [shape: f32[16,1], index: 4, kind: input, shape index: {}]
  %s5 = inlined_call_operand.vmem [shape: f32[16,1], index: 5, kind: input, shape index: {}]
  %s6 = inlined_call_operand.<no memory space> [shape: f32[1], index: 6, kind: input, shape index: {}]
  %s7 = inlined_call_operand.hbm [shape: f32[1,128], index: 7, kind: output, shape index: {}]
  %s8 = sld [smem:[#allocation0]]
  $region38: #{tpu_custom_call.1} parent=0
    _
  %s10 = ssub.s32 1, %s8
  %s11 = scalar_select 0, %s10, %s8
  %12 = sst [smem:[#allocation2]] %s6
  $region1: #{tpu_custom_call.1} parent=0
    #allocation3 [shape = 'u8[512]{0}', space=vmem, size = 0x400, scoped, tag = 'output window, operand 0, single buffered']
    #allocation4 [shape = 's32[1]{0}', space=sflag, size = 0x4, scoped, tag = 'scoped memory for tpu_custom_call.1']
    %13 = vsyncpa [#allocation4], 0
    // Predicated region
    $region2: #{tpu_custom_call.1} parent=1 // pred_check
      _
    $region3: #{tpu_custom_call.1} parent=1 // pred_check_branch
      %15 = sbr.rel (0) target = $region5
    $region4: #{tpu_custom_call.1} parent=1 // pred_region
      _
    $region5: #{tpu_custom_call.1} parent=1 // pred_fallthru
      _
    // Predicated region
    $region6: #{tpu_custom_call.1} parent=1 // pred_check
      _
    $region7: #{tpu_custom_call.1} parent=1 // pred_check_branch
      %17 = sbr.rel (0) target = $region9
    $region8: #{tpu_custom_call.1} parent=1 // pred_region
      _
    $region9: #{tpu_custom_call.1} parent=1 // pred_fallthru
      _
    // Predicated region
    $region10: #{tpu_custom_call.1} parent=1 // pred_check
      _
    $region11: #{tpu_custom_call.1} parent=1 // pred_check_branch
      %19 = sbr.rel (0) target = $region13
    $region12: #{tpu_custom_call.1} parent=1 // pred_region
      _
    $region13: #{tpu_custom_call.1} parent=1 // pred_fallthru
      _
    // Predicated region
    $region14: #{tpu_custom_call.1} parent=1 // pred_check
      _
    $region15: #{tpu_custom_call.1} parent=1 // pred_check_branch
      %21 = sbr.rel (0) target = $region17
    $region16: #{tpu_custom_call.1} parent=1 // pred_region
      _
    $region17: #{tpu_custom_call.1} parent=1 // pred_fallthru
      _
    // Predicated region
    $region18: #{tpu_custom_call.1} parent=1 // pred_check
      _
    $region19: #{tpu_custom_call.1} parent=1 // pred_check_branch
      %23 = sbr.rel (0) target = $region21
    $region20: #{tpu_custom_call.1} parent=1 // pred_region
      _
    $region21: #{tpu_custom_call.1} parent=1 // pred_fallthru
      _
    // Predicated region
    $region22: #{tpu_custom_call.1} parent=1 // pred_check
      _
    $region23: #{tpu_custom_call.1} parent=1 // pred_check_branch
      %25 = sbr.rel (0) target = $region25
    $region24: #{tpu_custom_call.1} parent=1 // pred_region
      _
    $region25: #{tpu_custom_call.1} parent=1 // pred_fallthru
      _
    // Predicated region
    $region26: #{tpu_custom_call.1} parent=1 // pred_check
      _
    $region27: #{tpu_custom_call.1} parent=1 // pred_check_branch
      %27 = sbr.rel (0) target = $region29
    $region28: #{tpu_custom_call.1} parent=1 // pred_region
      _
    $region29: #{tpu_custom_call.1} parent=1 // pred_fallthru
      _
    %v29 = vld [vmem:[%s0] sm:$0xf]
    %v30 = vld [vmem:[%s0 + $0x4] sm:$0xf]
    %v31 = vld [vmem:[%s0 + $0x8] sm:$0xf]
    %v32 = vld [vmem:[%s0 + $0xc] sm:$0xf]
    %v33 = vld [vmem:[%s1] sm:$0xf]
    %v34 = vld [vmem:[%s1 + $0x4] sm:$0xf]
    %v35 = vld [vmem:[%s1 + $0x8] sm:$0xf]
    %v36 = vld [vmem:[%s1 + $0xc] sm:$0xf]
    %v37 = vld [vmem:[%s2] sm:$0xff]
    %v38 = vld [vmem:[%s2 + $0x8] sm:$0xff]
    %v39 = vld [vmem:[%s2 + $0x10] sm:$0xff]
    %v40 = vld [vmem:[%s2 + $0x18] sm:$0xff]
    %42 = vset.pattern.permute.xlu0 0
    %43 = vperm.xlu0 %42, %v37
    %v44 = vpop.permute.xlu0 %43
    %47 = vset.pattern.permute.xlu0 0
    %48 = vperm.xlu0 %47, %v38
    %v49 = vpop.permute.xlu0 %48
    %52 = vset.pattern.permute.xlu0 0
    %53 = vperm.xlu0 %52, %v39
    %v54 = vpop.permute.xlu0 %53
    %57 = vset.pattern.permute.xlu0 0
    %58 = vperm.xlu0 %57, %v40
    %v59 = vpop.permute.xlu0 %58
    %v65 = vunpack.c.l.b16 %v33
    %v66 = vunpack.c.l.b16 %v34
    %v67 = vunpack.c.l.b16 %v35
    %v68 = vunpack.c.l.b16 %v36
    %v69 = vpack.c.b16 %v66, %v65
    %v70 = vpack.c.b16 %v68, %v67
    %v75 = vunpack.c.l.b16 %v29
    %v76 = vunpack.c.l.b16 %v30
    %v77 = vunpack.c.l.b16 %v31
    %v78 = vunpack.c.l.b16 %v32
    %v79 = vpack.c.b16 %v76, %v75
    %v80 = vpack.c.b16 %v78, %v77
    %vm83 = vcmask 261120
    %v85 = vsel %vm83, %v69, 0
    %v88 = vsel %vm83, %v70, 0
    %90 = vmatpush.bf16.msra.mxu0 0
    %91 = vmatpush.bf16.msra.mxu0 0
    %92 = vmatpush.bf16.msra.mxu0 0
    %93 = vmatpush.bf16.msra.mxu0 0
    %94 = vmatpush.bf16.msra.mxu0 0
    %95 = vmatpush.bf16.msra.mxu0 0
    %96 = vmatpush.bf16.msra.mxu0 %v80
    %97 = vmatpush.bf16.msra.mxu0 %v79
    %98 = vmatmul.bf16.gmra.mxu0 %v85
    %v99 = vpop.f32.mrf.mxu0
    %v100 = vadd.f32 %v44, %v99
    %v101 = vpop.f32.mrf.mxu0
    %v102 = vadd.f32 %v49, %v101
    %103 = vmatmul.bf16.gmra.mxu0 %v88
    %v104 = vpop.f32.mrf.mxu0
    %v105 = vadd.f32 %v54, %v104
    %v106 = vpop.f32.mrf.mxu0
    %v107 = vadd.f32 %v59, %v106
    %108 = vdwg.mxu0
    %v109 = vmax.f32 %v100, 0.0
    %v110 = vmax.f32 %v102, 0.0
    %v111 = vmax.f32 %v105, 0.0
    %v112 = vmax.f32 %v107, 0.0
    %v113 = vld [vmem:[%s3] sm:$0xf]
    %v114 = vld [vmem:[%s3 + $0x4] sm:$0xf]
    %v115 = vpack.c.bf16 %v110, %v109
    %v116 = vpack.c.bf16 %v112, %v111
    %v117 = vld [vmem:[%s4] sm:$0xff]
    %v118 = vld [vmem:[%s4 + $0x8] sm:$0xff]
    %120 = vset.pattern.permute.xlu0 0
    %121 = vperm.xlu0 %120, %v117
    %v122 = vpop.permute.xlu0 %121
    %125 = vset.pattern.permute.xlu0 0
    %126 = vperm.xlu0 %125, %v118
    %v127 = vpop.permute.xlu0 %126
    %v131 = vunpack.c.l.b16 %v113
    %v132 = vunpack.c.l.b16 %v114
    %v133 = vpack.c.b16 %v132, %v131
    %v135 = vsel %vm83, %v133, 0
    %137 = vmatpush.bf16.msra.mxu0 0
    %138 = vmatpush.bf16.msra.mxu0 0
    %139 = vmatpush.bf16.msra.mxu0 0
    %140 = vmatpush.bf16.msra.mxu0 0
    %141 = vmatpush.bf16.msra.mxu0 0
    %142 = vmatpush.bf16.msra.mxu0 0
    %143 = vmatpush.bf16.msra.mxu0 %v116
    %144 = vmatpush.bf16.msra.mxu0 %v115
    %145 = vmatmul.bf16.gmra.mxu0 %v135
    %v146 = vpop.f32.mrf.mxu0
    %v147 = vadd.f32 %v122, %v146
    %v148 = vpop.f32.mrf.mxu0
    %v149 = vadd.f32 %v127, %v148
    %150 = vdwg.mxu0
    %v151 = vmax.f32 %v147, 0.0
    %v152 = vmax.f32 %v149, 0.0
    %v153 = vld [vmem:[%s5] sm:$0xff]
    %v154 = vld [vmem:[%s5 + $0x8] sm:$0xff]
    %156 = vset.pattern.permute.xlu0 0
    %157 = vperm.xlu0 %156, %v153
    %v158 = vpop.permute.xlu0 %157
    %161 = vset.pattern.permute.xlu0 0
    %162 = vperm.xlu0 %161, %v154
    %v163 = vpop.permute.xlu0 %162
    %v165 = vmul.f32 %v151, %v158
    %v166 = vmul.f32 %v152, %v163
    %v167 = vadd.f32 %v165, %v166
    %v168 = vrot.slane %v167, 4
    %v169 = vadd.f32 %v167, %v168
    %v170 = vrot.slane %v169, 2
    %v171 = vadd.f32 %v169, %v170
    %v172 = vrot.slane %v171, 1
    %v173 = vadd.f32 %v171, %v172
    %s174 = sld [smem:[#allocation2]]
    %v175 = vstv %s174
    %v176 = vadd.f32 %v173, %v175
    %177 = vst [vmem:[#allocation3] sm:$0x1] %v176
    // Predicated region
    $region30: #{tpu_custom_call.1} parent=1 // pred_check
      _
    $region31: #{tpu_custom_call.1} parent=1 // pred_check_branch
      %179 = sbr.rel (0) target = $region33
    $region32: #{tpu_custom_call.1} parent=1 // pred_region
      %181 = vsyncadd [#allocation4], 0
      %s183 = sshll.u32 [#allocation3], 4
      %s184 = int_to_ptr.vmem [resolvable:$true] %s183
      %s185 = sshll.u32 %s7, 4
      %s186 = int_to_ptr.hbm [resolvable:$true] %s185
      %188 = dma.vmem_to_hbm [thread:$0]  %s184, 16, %s186, [#allocation4]
    $region33: #{tpu_custom_call.1} parent=1 // pred_fallthru
      _
    // Predicated region
    $region34: #{tpu_custom_call.1} parent=1 // pred_check
      _
    $region35: #{tpu_custom_call.1} parent=1 // pred_check_branch
      %190 = sbr.rel (0) target = $region37
    $region36: #{tpu_custom_call.1} parent=1 // pred_region
      %192 = dma.done [#allocation4], 16
    $region37: #{tpu_custom_call.1} parent=1 // pred_fallthru
      _
    %193 = vsyncpa [#allocation4], 1

</llo_original>
